<compile_context>
chip_gen: v7x
topology: tpu7x:2x2x1
jax: 0.10.0
libtpu: 0.0.40
codegen_flags: <defaults>
</compile_context>

<pallas_src>
import functools

import jax
import jax.numpy as jnp
from jax.experimental import pallas as pl
from jax.experimental.pallas import tpu as pltpu

_K_QUANT = 16  # bf16 sublane-packing quantum; layer-1 contraction dim padded to this.


def _round_up(x, m):
    return ((x + m - 1) // m) * m


def actor_kernel(x_ref, w1_ref, b1_ref, w2_ref, b2_ref, w3_ref, b3_ref, o_ref):
    # Layer 1: Linear (bf16 operands, f32 accumulate) + bias/ReLU in f32.
    h1 = jnp.dot(x_ref[...], w1_ref[...], preferred_element_type=jnp.float32)
    h1 = jnp.maximum(h1 + b1_ref[...], 0.0)
    # Layer 2.
    h2 = jnp.dot(h1.astype(jnp.bfloat16), w2_ref[...],
                 preferred_element_type=jnp.float32)
    h2 = jnp.maximum(h2 + b2_ref[...], 0.0)
    # Layer 3 + Tanh (output block is the un-padded (tb, action_dim)).
    h3 = jnp.dot(h2.astype(jnp.bfloat16), w3_ref[...],
                 preferred_element_type=jnp.float32)
    o_ref[...] = jnp.tanh(h3 + b3_ref[...]).astype(o_ref.dtype)


def prepare_actor_params(params):
    """One-time packing (hoisted out of the hot path).

    Casts weights to bf16, keeps biases f32, zero-pads only w1's contraction
    dim (state_dim -> multiple of 16). Zero rows contribute nothing to the dot.
    """
    w1, b1, w2, b2, w3, b3 = (params["w1"], params["b1"], params["w2"],
                              params["b2"], params["w3"], params["b3"])
    state_dim, hidden = w1.shape
    k_pad = _round_up(state_dim, _K_QUANT)
    w1p = jnp.zeros((k_pad, hidden), jnp.bfloat16).at[:state_dim, :].set(
        w1.astype(jnp.bfloat16))
    return {
        "w1": w1p,
        "b1": b1.astype(jnp.float32).reshape(1, -1),
        "w2": w2.astype(jnp.bfloat16),
        "b2": b2.astype(jnp.float32).reshape(1, -1),
        "w3": w3.astype(jnp.bfloat16),
        "b3": b3.astype(jnp.float32).reshape(1, -1),
    }


@functools.partial(jax.jit, static_argnames=("batch_tile",))
def actor_forward(state, packed, *, batch_tile=1024):
    """state: (B, state_dim) f32. packed: output of prepare_actor_params()."""
    w1, b1, w2, b2, w3, b3 = (packed["w1"], packed["b1"], packed["w2"],
                              packed["b2"], packed["w3"], packed["b3"])
    B, state_dim = state.shape
    k_pad = w1.shape[0]
    action_dim = w3.shape[1]

    # Batch tile: big tiles for large B; for moderate B aim for >=2 grid steps
    # so the "parallel" axis splits across v7x's two TensorCores. Always a
    # multiple of 16 (bf16 lhs sublane packing).
    if B >= 2 * batch_tile:
        tb = batch_tile
    else:
        tb = min(batch_tile, max(16, _round_up((B + 1) // 2, 16)))
    b_pad = _round_up(B, tb)
    grid = (b_pad // tb,)

    # Single fused pad+cast pass: (B, state_dim) f32 -> (b_pad, k_pad) bf16.
    # Explicit batch-dim zero pad keeps the tail rows defined (sliced off below).
    x = jnp.pad(state, ((0, b_pad - B), (0, k_pad - state_dim))).astype(jnp.bfloat16)

    # Weights/biases: full-array blocks with constant index maps -> VMEM-resident,
    # DMA'd once (index never changes across grid steps).
    def resident(a):
        return pl.BlockSpec(a.shape, lambda i: (0,) * a.ndim)

    out = pl.pallas_call(
        actor_kernel,
        out_shape=jax.ShapeDtypeStruct((b_pad, action_dim), jnp.float32),
        grid=grid,
        in_specs=[
            pl.BlockSpec((tb, k_pad), lambda i: (i, 0)),   # x: streamed per tile
            resident(w1), resident(b1),
            resident(w2), resident(b2),
            resident(w3), resident(b3),
        ],
        out_specs=pl.BlockSpec((tb, action_dim), lambda i: (i, 0)),
        compiler_params=pltpu.CompilerParams(
            dimension_semantics=("parallel",),      # shard batch across TCs (v7x)
            vmem_limit_bytes=32 * 1024 * 1024,      # explicit, portable budget
        ),
    )(x, w1, b1, w2, b2, w3, b3)
    return out[:B]


def init_actor_params(key, state_dim, action_dim, hidden_size=256):
    """Matches nn.Linear default init U(-1/sqrt(fan_in), 1/sqrt(fan_in)); stored (in, out)."""
    def linear(key, fan_in, fan_out):
        kw, kb = jax.random.split(key)
        bound = 1.0 / jnp.sqrt(float(fan_in))
        w = jax.random.uniform(kw, (fan_in, fan_out), jnp.float32, -bound, bound)
        b = jax.random.uniform(kb, (1, fan_out), jnp.float32, -bound, bound)
        return w, b

    k1, k2, k3 = jax.random.split(key, 3)
    w1, b1 = linear(k1, state_dim, hidden_size)
    w2, b2 = linear(k2, hidden_size, hidden_size)
    w3, b3 = linear(k3, hidden_size, action_dim)
    return {"w1": w1, "b1": b1, "w2": w2, "b2": b2, "w3": w3, "b3": b3}


def actor_reference_f32(state, params):
    h1 = jnp.maximum(state @ params["w1"] + params["b1"], 0.0)
    h2 = jnp.maximum(h1 @ params["w2"] + params["b2"], 0.0)
    return jnp.tanh(h2 @ params["w3"] + params["b3"])


def actor_reference_mixed(state, params):
    """Same math as the kernel: bf16 matmul operands, f32 accumulate/elementwise."""
    bf = jnp.bfloat16
    h1 = jnp.dot(state.astype(bf), params["w1"].astype(bf),
                 preferred_element_type=jnp.float32) + params["b1"]
    h1 = jnp.maximum(h1, 0.0)
    h2 = jnp.dot(h1.astype(bf), params["w2"].astype(bf),
                 preferred_element_type=jnp.float32) + params["b2"]
    h2 = jnp.maximum(h2, 0.0)
    h3 = jnp.dot(h2.astype(bf), params["w3"].astype(bf),
                 preferred_element_type=jnp.float32) + params["b3"]
    return jnp.tanh(h3)


if __name__ == "__main__":
    # StockTradingEnvironment with num_stocks=4 -> state_dim = 2*4+1 = 9, action_dim = 4.
    batch = 2
    num_stocks = 4
    state_dim = num_stocks * 2 + 1     # 9
    action_dim = num_stocks            # 4
    hidden_size = 32                   # small hidden for the synthetic test (256 in the real Actor)

    key = jax.random.PRNGKey(0)
    k_params, k_state, k_big = jax.random.split(key, 3)
    params = init_actor_params(k_params, state_dim, action_dim, hidden_size)
    packed = prepare_actor_params(params)   # one-time weight packing (hoisted out of hot path)
    # Normalized observations (keeps bf16-operand matmul error small, as in practice).
    state = jax.random.uniform(k_state, (batch, state_dim), jnp.float32, 0.0, 1.0)

    out = jax.block_until_ready(actor_forward(state, packed))
    assert out.shape == (batch, action_dim)
    assert bool(jnp.all(jnp.isfinite(out)))
    # Tight check against the identical mixed-precision math; loose check vs pure f32.
    assert jnp.allclose(out, actor_reference_mixed(state, params), atol=5e-3, rtol=5e-3)
    assert jnp.allclose(out, actor_reference_f32(state, params), atol=5e-2, rtol=5e-2)

    # Exercise the multi-tile (gridded, pipelined) path: B=40, tile=16 -> 3 grid steps + tail padding.
    state_big = jax.random.uniform(k_big, (40, state_dim), jnp.float32, 0.0, 1.0)
    out_big = jax.block_until_ready(actor_forward(state_big, packed, batch_tile=16))
    assert out_big.shape == (40, action_dim)
    assert jnp.allclose(out_big, actor_reference_mixed(state_big, params),
                        atol=5e-3, rtol=5e-3)

    print("KERNEL_OK")
</pallas_src>

<mosaic_0001>
module attributes {stable_mosaic.version = 11 : i64} {
  func.func @actor_kernel(%arg0: i32, %arg1: memref<16x16xbf16, #tpu.memory_space<vmem>>, %arg2: memref<16x32xbf16, #tpu.memory_space<vmem>>, %arg3: memref<1x32xf32, #tpu.memory_space<vmem>>, %arg4: memref<32x32xbf16, #tpu.memory_space<vmem>>, %arg5: memref<1x32xf32, #tpu.memory_space<vmem>>, %arg6: memref<32x4xbf16, #tpu.memory_space<vmem>>, %arg7: memref<1x4xf32, #tpu.memory_space<vmem>>, %arg8: memref<16x4xf32, #tpu.memory_space<vmem>>) attributes {dimension_semantics = [#tpu.dimension_semantics<parallel>], iteration_bounds = array<i64: 1>, scalar_prefetch = 0 : i64, scratch_operands = 0 : i64, tpu.core_type = #tpu.core_type<tc>, window_params = [{transform_indices = @transform_0, window_bounds = array<i64: 16, 16>}, {pipeline_mode = #tpu.pipeline_mode<synchronous>, transform_indices = @transform_1, window_bounds = array<i64: 16, 32>}, {pipeline_mode = #tpu.pipeline_mode<synchronous>, transform_indices = @transform_2, window_bounds = array<i64: 1, 32>}, {pipeline_mode = #tpu.pipeline_mode<synchronous>, transform_indices = @transform_3, window_bounds = array<i64: 32, 32>}, {pipeline_mode = #tpu.pipeline_mode<synchronous>, transform_indices = @transform_4, window_bounds = array<i64: 1, 32>}, {pipeline_mode = #tpu.pipeline_mode<synchronous>, transform_indices = @transform_5, window_bounds = array<i64: 32, 4>}, {pipeline_mode = #tpu.pipeline_mode<synchronous>, transform_indices = @transform_6, window_bounds = array<i64: 1, 4>}, {transform_indices = @transform_7, window_bounds = array<i64: 16, 4>}]} {
    %c0 = arith.constant 0 : index
    %c0_0 = arith.constant 0 : index
    %0 = vector.load %arg1[%c0, %c0_0] : memref<16x16xbf16, #tpu.memory_space<vmem>>, vector<16x16xbf16>
    %c0_1 = arith.constant 0 : index
    %c0_2 = arith.constant 0 : index
    %1 = vector.load %arg2[%c0_1, %c0_2] : memref<16x32xbf16, #tpu.memory_space<vmem>>, vector<16x32xbf16>
    %cst = arith.constant dense<0.000000e+00> : vector<16x32xf32>
    %2 = tpu.matmul %0, %1, %cst {dimension_numbers = #tpu.dot_dimension_numbers<[1], [0], [0], [1], [0, 0, 1, 1], [], []>} : vector<16x16xbf16>, vector<16x32xbf16>, vector<16x32xf32> -> vector<16x32xf32>
    %c0_3 = arith.constant 0 : index
    %c0_4 = arith.constant 0 : index
    %3 = vector.load %arg3[%c0_3, %c0_4] : memref<1x32xf32, #tpu.memory_space<vmem>>, vector<1x32xf32>
    %4 = vector.broadcast %3 : vector<1x32xf32> to vector<16x32xf32>
    %5 = arith.addf %2, %4 : vector<16x32xf32>
    %cst_5 = arith.constant 0.000000e+00 : f32
    %6 = vector.broadcast %cst_5 : f32 to vector<16x32xf32>
    %7 = arith.maximumf %5, %6 : vector<16x32xf32>
    %8 = arith.truncf %7 : vector<16x32xf32> to vector<16x32xbf16>
    %c0_6 = arith.constant 0 : index
    %c0_7 = arith.constant 0 : index
    %9 = vector.load %arg4[%c0_6, %c0_7] : memref<32x32xbf16, #tpu.memory_space<vmem>>, vector<32x32xbf16>
    %cst_8 = arith.constant dense<0.000000e+00> : vector<16x32xf32>
    %10 = tpu.matmul %8, %9, %cst_8 {dimension_numbers = #tpu.dot_dimension_numbers<[1], [0], [0], [1], [0, 0, 1, 1], [], []>} : vector<16x32xbf16>, vector<32x32xbf16>, vector<16x32xf32> -> vector<16x32xf32>
    %c0_9 = arith.constant 0 : index
    %c0_10 = arith.constant 0 : index
    %11 = vector.load %arg5[%c0_9, %c0_10] : memref<1x32xf32, #tpu.memory_space<vmem>>, vector<1x32xf32>
    %12 = vector.broadcast %11 : vector<1x32xf32> to vector<16x32xf32>
    %13 = arith.addf %10, %12 : vector<16x32xf32>
    %cst_11 = arith.constant 0.000000e+00 : f32
    %14 = vector.broadcast %cst_11 : f32 to vector<16x32xf32>
    %15 = arith.maximumf %13, %14 : vector<16x32xf32>
    %16 = arith.truncf %15 : vector<16x32xf32> to vector<16x32xbf16>
    %c0_12 = arith.constant 0 : index
    %c0_13 = arith.constant 0 : index
    %17 = vector.load %arg6[%c0_12, %c0_13] : memref<32x4xbf16, #tpu.memory_space<vmem>>, vector<32x4xbf16>
    %cst_14 = arith.constant dense<0.000000e+00> : vector<16x4xf32>
    %18 = tpu.matmul %16, %17, %cst_14 {dimension_numbers = #tpu.dot_dimension_numbers<[1], [0], [0], [1], [0, 0, 1, 1], [], []>} : vector<16x32xbf16>, vector<32x4xbf16>, vector<16x4xf32> -> vector<16x4xf32>
    %c0_15 = arith.constant 0 : index
    %c0_16 = arith.constant 0 : index
    %19 = vector.load %arg7[%c0_15, %c0_16] : memref<1x4xf32, #tpu.memory_space<vmem>>, vector<1x4xf32>
    %20 = vector.broadcast %19 : vector<1x4xf32> to vector<16x4xf32>
    %21 = arith.addf %18, %20 : vector<16x4xf32>
    %22 = math.tanh %21 : vector<16x4xf32>
    %c0_17 = arith.constant 0 : index
    %c0_18 = arith.constant 0 : index
    %23 = vector.load %arg8[%c0_17, %c0_18] : memref<16x4xf32, #tpu.memory_space<vmem>>, vector<16x4xf32>
    tpu.vector_store %arg8[%c0_17, %c0_18], %22 {strides = array<i32>} : memref<16x4xf32, #tpu.memory_space<vmem>>, vector<16x4xf32>,
    return
  }
  func.func @transform_0(%arg0: i32) -> (i32, i32) {
    %c0_i32 = arith.constant 0 : i32
    %c0_i32_0 = arith.constant 0 : i32
    return %arg0, %c0_i32 : i32, i32
  }
  func.func @transform_1(%arg0: i32) -> (i32, i32) {
    %c0_i32 = arith.constant 0 : i32
    %c0_i32_0 = arith.constant 0 : i32
    %c0_i32_1 = arith.constant 0 : i32
    return %c0_i32, %c0_i32_0 : i32, i32
  }
  func.func @transform_2(%arg0: i32) -> (i32, i32) {
    %c0_i32 = arith.constant 0 : i32
    %c0_i32_0 = arith.constant 0 : i32
    %c0_i32_1 = arith.constant 0 : i32
    return %c0_i32, %c0_i32_0 : i32, i32
  }
  func.func @transform_3(%arg0: i32) -> (i32, i32) {
    %c0_i32 = arith.constant 0 : i32
    %c0_i32_0 = arith.constant 0 : i32
    %c0_i32_1 = arith.constant 0 : i32
    return %c0_i32, %c0_i32_0 : i32, i32
  }
  func.func @transform_4(%arg0: i32) -> (i32, i32) {
    %c0_i32 = arith.constant 0 : i32
    %c0_i32_0 = arith.constant 0 : i32
    %c0_i32_1 = arith.constant 0 : i32
    return %c0_i32, %c0_i32_0 : i32, i32
  }
  func.func @transform_5(%arg0: i32) -> (i32, i32) {
    %c0_i32 = arith.constant 0 : i32
    %c0_i32_0 = arith.constant 0 : i32
    %c0_i32_1 = arith.constant 0 : i32
    return %c0_i32, %c0_i32_0 : i32, i32
  }
  func.func @transform_6(%arg0: i32) -> (i32, i32) {
    %c0_i32 = arith.constant 0 : i32
    %c0_i32_0 = arith.constant 0 : i32
    %c0_i32_1 = arith.constant 0 : i32
    return %c0_i32, %c0_i32_0 : i32, i32
  }
  func.func @transform_7(%arg0: i32) -> (i32, i32) {
    %c0_i32 = arith.constant 0 : i32
    %c0_i32_0 = arith.constant 0 : i32
    return %arg0, %c0_i32 : i32, i32
  }
}

</mosaic_0001>

<llo_original>
// kernel: actor_forward.1
$region0: #{actor_forward.1}
  #allocation0 [shape = 'u32[]', space=smem, size = 0x4, offset = 0x4, fixed_abs, tag = 'smem constant byte address 0x4 - core index']
  #allocation1 [shape = 'u32[144,128]{1,0:T(1,128)}', space=vmem, size = 0x12000, scoped, tag = 'internal scratch']
  %s0 = inlined_call_operand.vmem [shape: bf16[16,16], index: 0, kind: input, shape index: {}]
  %s1 = inlined_call_operand.vmem [shape: bf16[16,32], index: 1, kind: input, shape index: {}]
  %s2 = inlined_call_operand.vmem [shape: f32[1,32], index: 2, kind: input, shape index: {}]
  %s3 = inlined_call_operand.vmem [shape: bf16[32,32], index: 3, kind: input, shape index: {}]
  %s4 = inlined_call_operand.vmem [shape: f32[1,32], index: 4, kind: input, shape index: {}]
  %s5 = inlined_call_operand.vmem [shape: bf16[32,4], index: 5, kind: input, shape index: {}]
  %s6 = inlined_call_operand.vmem [shape: f32[1,4], index: 6, kind: input, shape index: {}]
  %s7 = inlined_call_operand.vmem [shape: f32[16,4], index: 7, kind: output, shape index: {}]
  %s8 = sld [smem:[#allocation0]]
  $region38: #{actor_forward.1} parent=0
    _
  %s10 = ssub.s32 1, %s8
  %s11 = scalar_select 0, %s10, %s8
  // Predicated region
  $region2: #{actor_forward.1} parent=0 // pred_check
    _
  $region3: #{actor_forward.1} parent=0 // pred_check_branch
    %13 = sbr.rel (0) target = $region5
  $region4: #{actor_forward.1} parent=0 // pred_region
    _
  $region5: #{actor_forward.1} parent=0 // pred_fallthru
    _
  // Predicated region
  $region6: #{actor_forward.1} parent=0 // pred_check
    _
  $region7: #{actor_forward.1} parent=0 // pred_check_branch
    %15 = sbr.rel (0) target = $region9
  $region8: #{actor_forward.1} parent=0 // pred_region
    _
  $region9: #{actor_forward.1} parent=0 // pred_fallthru
    _
  // Predicated region
  $region10: #{actor_forward.1} parent=0 // pred_check
    _
  $region11: #{actor_forward.1} parent=0 // pred_check_branch
    %17 = sbr.rel (0) target = $region13
  $region12: #{actor_forward.1} parent=0 // pred_region
    _
  $region13: #{actor_forward.1} parent=0 // pred_fallthru
    _
  // Predicated region
  $region14: #{actor_forward.1} parent=0 // pred_check
    _
  $region15: #{actor_forward.1} parent=0 // pred_check_branch
    %19 = sbr.rel (0) target = $region17
  $region16: #{actor_forward.1} parent=0 // pred_region
    _
  $region17: #{actor_forward.1} parent=0 // pred_fallthru
    _
  // Predicated region
  $region18: #{actor_forward.1} parent=0 // pred_check
    _
  $region19: #{actor_forward.1} parent=0 // pred_check_branch
    %21 = sbr.rel (0) target = $region21
  $region20: #{actor_forward.1} parent=0 // pred_region
    _
  $region21: #{actor_forward.1} parent=0 // pred_fallthru
    _
  // Predicated region
  $region22: #{actor_forward.1} parent=0 // pred_check
    _
  $region23: #{actor_forward.1} parent=0 // pred_check_branch
    %23 = sbr.rel (0) target = $region25
  $region24: #{actor_forward.1} parent=0 // pred_region
    _
  $region25: #{actor_forward.1} parent=0 // pred_fallthru
    _
  // Predicated region
  $region26: #{actor_forward.1} parent=0 // pred_check
    _
  $region27: #{actor_forward.1} parent=0 // pred_check_branch
    %25 = sbr.rel (0) target = $region29
  $region28: #{actor_forward.1} parent=0 // pred_region
    _
  $region29: #{actor_forward.1} parent=0 // pred_fallthru
    _
  %v27 = vld [vmem:[%s0] sm:$0xf]
  %v28 = vld [vmem:[%s0 + $0x4] sm:$0xf]
  %v29 = vld [vmem:[%s1] sm:$0xf]
  %v30 = vld [vmem:[%s1 + $0x4] sm:$0xf]
  %v31 = vld [vmem:[%s2] sm:$0x1]
  %v33 = vlaneseq
  %v34 = vshrl.u32 %v33, 7
  %v35 = vsub.s32 0, %v34
  %v36 = vrot.slane %v31, %v35
  %v40 = vunpack.c.l.b16 %v27
  %v41 = vunpack.c.l.b16 %v28
  %v42 = vpack.c.b16 %v41, %v40
  %v45 = vunpack.c.l.b16 %v29
  %v46 = vunpack.c.l.b16 %v30
  %v47 = vpack.c.b16 %v46, %v45
  %vm49 = vcmask 130048
  %v51 = vsel %vm49, %v42, 0
  %53 = vmatprep.subr.bf16.mxu0 0
  %54 = vmatpush1.bf16.msra.mxu0 %v47
  %55 = vmatprep.subr.bf16.mxu0 0
  %56 = vmatpush1.bf16.msra.mxu0 0
  %57 = vmatprep.subr.bf16.mxu0 0
  %58 = vmatpush1.bf16.msra.mxu0 0
  %59 = vmatprep.subr.bf16.mxu0 0
  %60 = vmatpush1.bf16.msra.mxu0 0
  %61 = vmatprep.subr.bf16.mxu0 0
  %62 = vmatpush1.bf16.msra.mxu0 0
  %63 = vmatprep.subr.bf16.mxu0 0
  %64 = vmatpush1.bf16.msra.mxu0 0
  %65 = vmatprep.subr.bf16.mxu0 0
  %66 = vmatpush1.bf16.msra.mxu0 0
  %67 = vmatprep.subr.bf16.mxu0 0
  %68 = vmatpush1.bf16.msra.mxu0 0
  %69 = vmatprep.subr.bf16.mxu0 0
  %70 = vmatpush1.bf16.msra.mxu0 0
  %71 = vmatprep.subr.bf16.mxu0 0
  %72 = vmatpush1.bf16.msra.mxu0 0
  %73 = vmatprep.subr.bf16.mxu0 0
  %74 = vmatpush1.bf16.msra.mxu0 0
  %75 = vmatprep.subr.bf16.mxu0 0
  %76 = vmatpush1.bf16.msra.mxu0 0
  %77 = vmatprep.subr.bf16.mxu0 0
  %78 = vmatpush1.bf16.msra.mxu0 0
  %79 = vmatprep.subr.bf16.mxu0 0
  %80 = vmatpush1.bf16.msra.mxu0 0
  %81 = vmatprep.subr.bf16.mxu0 0
  %82 = vmatpush1.bf16.msra.mxu0 0
  %83 = vmatprep.subr.bf16.mxu0 0
  %84 = vmatpush1.bf16.msra.mxu0 0
  %85 = vmatprep.mubr.bf16.mxu0 0
  %86 = vmatmul.mubr.bf16.gmra.mrb[0].mxu0 %v51
  %v87 = vpop.f32.mrb[0].mxu0
  %v88 = vadd.f32 %v36, %v87
  %v89 = vpop.f32.mrb[0].mxu0
  %v90 = vpop.f32.mrb[0].mxu0
  %v91 = vadd.f32 %v36, %v90
  %v92 = vpop.f32.mrb[0].mxu0
  %93 = vdwg.mxu0
  %v94 = vmax.f32 %v88, 0.0
  %v95 = vmax.f32 %v91, 0.0
  %v96 = vpack.c.bf16 %v95, %v94
  %v97 = vld [vmem:[%s3] sm:$0xf]
  %v98 = vld [vmem:[%s3 + $0x4] sm:$0xf]
  %v99 = vld [vmem:[%s3 + $0x8] sm:$0xf]
  %v100 = vld [vmem:[%s3 + $0xc] sm:$0xf]
  %v101 = vld [vmem:[%s4] sm:$0x1]
  %v103 = vlaneseq
  %v104 = vshrl.u32 %v103, 7
  %v105 = vsub.s32 0, %v104
  %v106 = vrot.slane %v101, %v105
  %v112 = vunpack.c.l.b16 %v97
  %v113 = vunpack.c.l.b16 %v98
  %v114 = vunpack.c.l.b16 %v99
  %v115 = vunpack.c.l.b16 %v100
  %v116 = vpack.c.b16 %v113, %v112
  %v117 = vpack.c.b16 %v115, %v114
  %vm120 = vcmask 261120
  %v122 = vsel %vm120, %v96, 0
  %124 = vmatprep.subr.bf16.mxu0 0
  %125 = vmatpush1.bf16.msra.mxu0 %v116
  %126 = vmatprep.subr.bf16.mxu0 0
  %127 = vmatpush1.bf16.msra.mxu0 %v117
  %128 = vmatprep.subr.bf16.mxu0 0
  %129 = vmatpush1.bf16.msra.mxu0 0
  %130 = vmatprep.subr.bf16.mxu0 0
  %131 = vmatpush1.bf16.msra.mxu0 0
  %132 = vmatprep.subr.bf16.mxu0 0
  %133 = vmatpush1.bf16.msra.mxu0 0
  %134 = vmatprep.subr.bf16.mxu0 0
  %135 = vmatpush1.bf16.msra.mxu0 0
  %136 = vmatprep.subr.bf16.mxu0 0
  %137 = vmatpush1.bf16.msra.mxu0 0
  %138 = vmatprep.subr.bf16.mxu0 0
  %139 = vmatpush1.bf16.msra.mxu0 0
  %140 = vmatprep.subr.bf16.mxu0 0
  %141 = vmatpush1.bf16.msra.mxu0 0
  %142 = vmatprep.subr.bf16.mxu0 0
  %143 = vmatpush1.bf16.msra.mxu0 0
  %144 = vmatprep.subr.bf16.mxu0 0
  %145 = vmatpush1.bf16.msra.mxu0 0
  %146 = vmatprep.subr.bf16.mxu0 0
  %147 = vmatpush1.bf16.msra.mxu0 0
  %148 = vmatprep.subr.bf16.mxu0 0
  %149 = vmatpush1.bf16.msra.mxu0 0
  %150 = vmatprep.subr.bf16.mxu0 0
  %151 = vmatpush1.bf16.msra.mxu0 0
  %152 = vmatprep.subr.bf16.mxu0 0
  %153 = vmatpush1.bf16.msra.mxu0 0
  %154 = vmatprep.subr.bf16.mxu0 0
  %155 = vmatpush1.bf16.msra.mxu0 0
  %156 = vmatprep.mubr.bf16.mxu0 0
  %157 = vmatmul.mubr.bf16.gmra.mrb[0].mxu0 %v122
  %v158 = vpop.f32.mrb[0].mxu0
  %v159 = vadd.f32 %v106, %v158
  %v160 = vpop.f32.mrb[0].mxu0
  %v161 = vpop.f32.mrb[0].mxu0
  %v162 = vadd.f32 %v106, %v161
  %v163 = vpop.f32.mrb[0].mxu0
  %164 = vdwg.mxu0
  %v165 = vmax.f32 %v159, 0.0
  %v166 = vmax.f32 %v162, 0.0
  %v167 = vpack.c.bf16 %v166, %v165
  %v168 = vld [vmem:[%s5] sm:$0xf]
  %v169 = vld [vmem:[%s5 + $0x4] sm:$0xf]
  %v170 = vld [vmem:[%s5 + $0x8] sm:$0xf]
  %v171 = vld [vmem:[%s5 + $0xc] sm:$0xf]
  %v172 = vld [vmem:[%s6] sm:$0x1]
  %v174 = vlaneseq
  %v175 = vshrl.u32 %v174, 7
  %v176 = vsub.s32 0, %v175
  %v177 = vrot.slane %v172, %v176
  %v183 = vunpack.c.l.b16 %v168
  %v184 = vunpack.c.l.b16 %v169
  %v185 = vunpack.c.l.b16 %v170
  %v186 = vunpack.c.l.b16 %v171
  %v187 = vpack.c.b16 %v184, %v183
  %v188 = vpack.c.b16 %v186, %v185
  %v192 = vsel %vm120, %v167, 0
  %194 = vmatprep.subr.bf16.mxu0 0
  %195 = vmatpush1.bf16.msra.mxu0 %v187
  %196 = vmatprep.subr.bf16.mxu0 0
  %197 = vmatpush1.bf16.msra.mxu0 %v188
  %198 = vmatprep.subr.bf16.mxu0 0
  %199 = vmatpush1.bf16.msra.mxu0 0
  %200 = vmatprep.subr.bf16.mxu0 0
  %201 = vmatpush1.bf16.msra.mxu0 0
  %202 = vmatprep.subr.bf16.mxu0 0
  %203 = vmatpush1.bf16.msra.mxu0 0
  %204 = vmatprep.subr.bf16.mxu0 0
  %205 = vmatpush1.bf16.msra.mxu0 0
  %206 = vmatprep.subr.bf16.mxu0 0
  %207 = vmatpush1.bf16.msra.mxu0 0
  %208 = vmatprep.subr.bf16.mxu0 0
  %209 = vmatpush1.bf16.msra.mxu0 0
  %210 = vmatprep.subr.bf16.mxu0 0
  %211 = vmatpush1.bf16.msra.mxu0 0
  %212 = vmatprep.subr.bf16.mxu0 0
  %213 = vmatpush1.bf16.msra.mxu0 0
  %214 = vmatprep.subr.bf16.mxu0 0
  %215 = vmatpush1.bf16.msra.mxu0 0
  %216 = vmatprep.subr.bf16.mxu0 0
  %217 = vmatpush1.bf16.msra.mxu0 0
  %218 = vmatprep.subr.bf16.mxu0 0
  %219 = vmatpush1.bf16.msra.mxu0 0
  %220 = vmatprep.subr.bf16.mxu0 0
  %221 = vmatpush1.bf16.msra.mxu0 0
  %222 = vmatprep.subr.bf16.mxu0 0
  %223 = vmatpush1.bf16.msra.mxu0 0
  %224 = vmatprep.subr.bf16.mxu0 0
  %225 = vmatpush1.bf16.msra.mxu0 0
  %226 = vmatprep.mubr.bf16.mxu0 0
  %227 = vmatmul.mubr.bf16.gmra.mrb[0].mxu0 %v192
  %v228 = vpop.f32.mrb[0].mxu0
  %v229 = vadd.f32 %v177, %v228
  %v230 = vpop.f32.mrb[0].mxu0
  %v231 = vpop.f32.mrb[0].mxu0
  %v232 = vadd.f32 %v177, %v231
  %v233 = vpop.f32.mrb[0].mxu0
  %234 = vdwg.mxu0
  %v235 = vtanh.pop %v229
  %v236 = vtanh.pop %v232
  %vm237 = vcmask 31744
  %238 = vst.msk [vmem:[%s7] sm:$0xff] %vm237, %v235
  %239 = vst.msk [vmem:[%s7 + $0x8] sm:$0xff] %vm237, %v236
  // Predicated region
  $region30: #{actor_forward.1} parent=0 // pred_check
    _
  $region31: #{actor_forward.1} parent=0 // pred_check_branch
    %241 = sbr.rel (0) target = $region33
  $region32: #{actor_forward.1} parent=0 // pred_region
    _
  $region33: #{actor_forward.1} parent=0 // pred_fallthru
    _
  // Predicated region
  $region34: #{actor_forward.1} parent=0 // pred_check
    _
  $region35: #{actor_forward.1} parent=0 // pred_check_branch
    %243 = sbr.rel (0) target = $region37
  $region36: #{actor_forward.1} parent=0 // pred_region
    _
  $region37: #{actor_forward.1} parent=0 // pred_fallthru
    _

</llo_original>
